<compile_context>
chip_gen: v7x
topology: tpu7x:2x2x1
jax: 0.10.0
libtpu: 0.0.40
codegen_flags: <defaults>
</compile_context>

<pallas_src>
import math

import jax
import jax.numpy as jnp
from jax.experimental import pallas as pl
from jax.experimental.pallas import tpu as pltpu


# ------------------------- hardware-aware defaults ---------------------------

def _vmem_budget_bytes():
    """64 MiB scoped budget on 128-MiB-VMEM parts (v5e/v6e), 32 MiB otherwise."""
    try:
        cap = pltpu.get_tpu_info().vmem_capacity_bytes
    except Exception:
        return 32 * 1024 * 1024
    return 64 * 1024 * 1024 if cap >= 100 * 1024 * 1024 else 32 * 1024 * 1024


_VMEM_LIMIT = _vmem_budget_bytes()
if _VMEM_LIMIT >= 64 * 1024 * 1024:      # v5e / v6e: 128 MiB physical VMEM
    _MM_TILES_MN = (512, 256, 128)
    _MM_TILES_K = (1024, 512, 256, 128)
else:                                    # v7x (64 MiB) or unknown: stay small
    _MM_TILES_MN = (256, 128)
    _MM_TILES_K = (512, 256, 128)


def _pick_tile(dim, candidates):
    """Largest candidate tile that divides `dim`, else the full dim.

    Falling back to the full dim is always legal for BlockSpec (block == array
    dim); for peak perf, pad inputs so dims hit a 128-multiple candidate."""
    for c in candidates:
        if dim % c == 0:
            return c
    return dim


# ------------------------------ tiled linear ---------------------------------

def _matmul_bias_kernel(x_ref, w_ref, b_ref, o_ref, acc_ref):
    @pl.when(pl.program_id(2) == 0)
    def _():
        acc_ref[...] = jnp.zeros_like(acc_ref)

    acc_ref[...] += jnp.dot(x_ref[...], w_ref[...],
                            preferred_element_type=jnp.float32)

    @pl.when(pl.program_id(2) == pl.num_programs(2) - 1)
    def _():
        o_ref[...] = (acc_ref[...] + b_ref[...].astype(jnp.float32)
                      ).astype(o_ref.dtype)


def tiled_linear(x, w, b, *, compute_dtype=None):
    """y = x @ w + b with a grid-tiled Pallas matmul (f32 accumulation)."""
    m, kdim = x.shape
    n = w.shape[1]
    out_dtype = x.dtype
    if compute_dtype is not None:          # bf16 MXU operands on v5e/v6e/v7x
        x = x.astype(compute_dtype)
        w = w.astype(compute_dtype)

    tm = _pick_tile(m, _MM_TILES_MN)
    tn = _pick_tile(n, _MM_TILES_MN)
    tk = _pick_tile(kdim, _MM_TILES_K)
    b2 = b.reshape(1, n).astype(jnp.float32)

    return pl.pallas_call(
        _matmul_bias_kernel,
        out_shape=jax.ShapeDtypeStruct((m, n), out_dtype),
        grid_spec=pltpu.PrefetchScalarGridSpec(
            num_scalar_prefetch=0,
            grid=(m // tm, n // tn, kdim // tk),
            in_specs=[
                pl.BlockSpec((tm, tk), lambda i, j, k: (i, k)),
                pl.BlockSpec((tk, tn), lambda i, j, k: (k, j)),
                pl.BlockSpec((1, tn), lambda i, j, k: (0, j)),
            ],
            out_specs=pl.BlockSpec((tm, tn), lambda i, j, k: (i, j)),
            scratch_shapes=[pltpu.VMEM((tm, tn), jnp.float32)],
        ),
        compiler_params=pltpu.CompilerParams(
            dimension_semantics=("parallel", "parallel", "arbitrary"),
            vmem_limit_bytes=_VMEM_LIMIT,
        ),
    )(x, w, b2)


# ------------------- output projection from head-major ctx -------------------

def _headmajor_linear_kernel(x_ref, w_ref, b_ref, o_ref, acc_ref):
    # x block: (1, 1, tL, Dv)  (batch b, head h)
    # w block: (1, Dv, tn)     (head h slab of the (H*Dv, N) weight)
    # reduction over heads (grid axis 3) -> folds the (H,L,Dv)->(L,H*Dv)
    # re-layout into the projection instead of an XLU transpose.
    @pl.when(pl.program_id(3) == 0)
    def _():
        acc_ref[...] = jnp.zeros_like(acc_ref)

    acc_ref[...] += jnp.dot(x_ref[0, 0], w_ref[0],
                            preferred_element_type=jnp.float32)

    @pl.when(pl.program_id(3) == pl.num_programs(3) - 1)
    def _():
        o_ref[0] = (acc_ref[...] + b_ref[...].astype(jnp.float32)
                    ).astype(o_ref.dtype)


def headmajor_out_projection(ctx, wo, bo, *, compute_dtype=None):
    """ctx: (B, H, L, Dv) head-major context; wo: (H*Dv, N) -> out (B, L, N)."""
    B, H, L, Dv = ctx.shape
    N = wo.shape[1]
    out_dtype = ctx.dtype
    w3 = wo.reshape(H, Dv, N)
    if compute_dtype is not None:
        ctx = ctx.astype(compute_dtype)
        w3 = w3.astype(compute_dtype)

    tL = _pick_tile(L, (256, 128, 64, 32, 16, 8))
    tn = _pick_tile(N, _MM_TILES_MN)
    b2 = bo.reshape(1, N).astype(jnp.float32)

    return pl.pallas_call(
        _headmajor_linear_kernel,
        out_shape=jax.ShapeDtypeStruct((B, L, N), out_dtype),
        grid_spec=pltpu.PrefetchScalarGridSpec(
            num_scalar_prefetch=0,
            grid=(B, L // tL, N // tn, H),
            in_specs=[
                pl.BlockSpec((1, 1, tL, Dv), lambda b, i, j, h: (b, h, i, 0)),
                pl.BlockSpec((1, Dv, tn), lambda b, i, j, h: (h, 0, j)),
                pl.BlockSpec((1, tn), lambda b, i, j, h: (0, j)),
            ],
            out_specs=pl.BlockSpec((1, tL, tn), lambda b, i, j, h: (b, i, j)),
            scratch_shapes=[pltpu.VMEM((tL, tn), jnp.float32)],
        ),
        compiler_params=pltpu.CompilerParams(
            dimension_semantics=("parallel", "parallel", "parallel",
                                 "arbitrary"),
            vmem_limit_bytes=_VMEM_LIMIT,
        ),
    )(ctx, w3, b2)


# --------------------------- multi-head attention ----------------------------

def multi_head_attention(q, k, v, *, return_attn=False, compute_dtype=None):
    """Head-major scaled-dot-product attention (scale already folded into q).

    q: (B, H, L, E), k: (B, H, S, E), v: (B, H, S, Dv)
      -> ctx: (B, H, L, Dv) head-major, attn: (B, H, L, S) f32 or None.
    """
    B, H, L, E = q.shape
    S = k.shape[2]
    Dv = v.shape[3]
    tL = _pick_tile(L, (256, 128, 64, 32, 16, 8))
    nL = L // tL

    def kernel(q_ref, k_ref, v_ref, *out_refs):
        qh = q_ref[0]                                  # (H, tL, E)
        kh = k_ref[0]                                  # (H, S, E)
        vh = v_ref[0]                                  # (H, S, Dv)
        if compute_dtype is not None:                  # bf16 MXU operands
            qh = qh.astype(compute_dtype)
            kh = kh.astype(compute_dtype)
            vh = vh.astype(compute_dtype)

        # scores[h, l, s] = sum_e q[h, l, e] * k[h, s, e]   (clean batched dot)
        scores = jax.lax.dot_general(
            qh, kh, (((2,), (2,)), ((0,), (0,))),
            preferred_element_type=jnp.float32)        # (H, tL, S)

        # numerically-stable softmax over S, f32 math
        m = jnp.max(scores, axis=-1, keepdims=True)
        p = jnp.exp(scores - m)
        denom = jnp.sum(p, axis=-1, keepdims=True)     # (H, tL, 1)

        if return_attn:
            o_ref, a_ref = out_refs
            p = p * (1.0 / denom)                      # exact: rows sum to 1
            a_ref[0] = p.astype(a_ref.dtype)
            ctx = jax.lax.dot_general(
                p.astype(vh.dtype), vh, (((2,), (1,)), ((0,), (0,))),
                preferred_element_type=jnp.float32)    # (H, tL, Dv)
        else:
            (o_ref,) = out_refs
            ctx = jax.lax.dot_general(
                p.astype(vh.dtype), vh, (((2,), (1,)), ((0,), (0,))),
                preferred_element_type=jnp.float32)
            # normalize the small context (L*H*Dv) instead of p (H*L*S);
            # approximate reciprocal runs on the EUP slot.
            ctx = ctx * pl.reciprocal(denom, approx=True)

        o_ref[0] = ctx.astype(o_ref.dtype)

    ctx_shape = jax.ShapeDtypeStruct((B, H, L, Dv), q.dtype)
    ctx_spec = pl.BlockSpec((1, H, tL, Dv), lambda b, i: (b, 0, i, 0))
    if return_attn:
        out_shape = (ctx_shape, jax.ShapeDtypeStruct((B, H, L, S), jnp.float32))
        out_specs = (ctx_spec,
                     pl.BlockSpec((1, H, tL, S), lambda b, i: (b, 0, i, 0)))
    else:
        out_shape = ctx_shape
        out_specs = ctx_spec

    res = pl.pallas_call(
        kernel,
        out_shape=out_shape,
        grid=(B, nL),
        in_specs=[
            pl.BlockSpec((1, H, tL, E), lambda b, i: (b, 0, i, 0)),
            pl.BlockSpec((1, H, S, E), lambda b, i: (b, 0, 0, 0)),
            pl.BlockSpec((1, H, S, Dv), lambda b, i: (b, 0, 0, 0)),
        ],
        out_specs=out_specs,
        compiler_params=pltpu.CompilerParams(
            dimension_semantics=("parallel", "parallel"),
            vmem_limit_bytes=_VMEM_LIMIT,
        ),
    )(q, k, v)

    if return_attn:
        ctx, attn = res
    else:
        ctx, attn = res, None
    return ctx, attn


# ---------------------------- AttentionLayer glue ----------------------------

def init_attention_layer(key, d_model, n_heads, d_keys=None, d_values=None,
                         dtype=jnp.float32):
    d_keys = d_keys or d_model // n_heads
    d_values = d_values or d_model // n_heads
    ks = jax.random.split(key, 8)

    def lin_init(kw, kb, fan_in, fan_out):
        bound = 1.0 / math.sqrt(fan_in)   # torch.nn.Linear default init
        w = jax.random.uniform(kw, (fan_in, fan_out), dtype, -bound, bound)
        b = jax.random.uniform(kb, (fan_out,), dtype, -bound, bound)
        return w, b

    wq, bq = lin_init(ks[0], ks[1], d_model, d_keys * n_heads)
    wk, bk = lin_init(ks[2], ks[3], d_model, d_keys * n_heads)
    wv, bv = lin_init(ks[4], ks[5], d_model, d_values * n_heads)
    wo, bo = lin_init(ks[6], ks[7], d_values * n_heads, d_model)

    # Fold 1/sqrt(E) into the Q projection (zero-cost at init), and precompute
    # the fused QKV weight once (no per-call concat).
    scale = 1.0 / math.sqrt(d_keys)
    wq_s, bq_s = wq * scale, bq * scale

    return {
        "q": (wq, bq), "k": (wk, bk), "v": (wv, bv), "o": (wo, bo),
        "q_scaled": (wq_s, bq_s),
        "w_qkv": jnp.concatenate([wq_s, wk, wv], axis=1),
        "b_qkv": jnp.concatenate([bq_s, bk, bv], axis=0),
        "n_heads": n_heads, "d_keys": d_keys, "d_values": d_values,
    }


def attention_layer_forward(params, queries, keys, values, attn_mask=None,
                            *, return_attn=True, compute_dtype=None):
    # TODO(synk): attn_mask is accepted but not applied (matches FullAttention
    # with mask_flag=False / attn_mask=None); causal masking not implemented.
    B, L, d_model = queries.shape
    _, S, _ = keys.shape
    H = params["n_heads"]
    dqk = params["d_keys"]
    dvv = params["d_values"]

    if (queries is keys) and (keys is values):
        # Self-attention: single fused QKV projection (precomputed weights).
        qkv = tiled_linear(queries.reshape(B * L, d_model),
                           params["w_qkv"], params["b_qkv"],
                           compute_dtype=compute_dtype)
        q = qkv[:, : H * dqk].reshape(B, L, H, dqk)
        k = qkv[:, H * dqk: 2 * H * dqk].reshape(B, S, H, dqk)
        v = qkv[:, 2 * H * dqk:].reshape(B, S, H, dvv)
    else:
        wq_s, bq_s = params["q_scaled"]
        wk, bk = params["k"]
        wv, bv = params["v"]
        q = tiled_linear(queries.reshape(B * L, d_model), wq_s, bq_s,
                         compute_dtype=compute_dtype).reshape(B, L, H, dqk)
        k = tiled_linear(keys.reshape(B * S, d_model), wk, bk,
                         compute_dtype=compute_dtype).reshape(B, S, H, dqk)
        v = tiled_linear(values.reshape(B * S, d_model), wv, bv,
                         compute_dtype=compute_dtype).reshape(B, S, H, dvv)

    # Single wrapper-side transpose to head-major (XLA fuses it with the
    # slice/reshape above); keeps QK^T / P@V as clean batched dots with no
    # in-kernel XLU relayouts.
    q = jnp.transpose(q, (0, 2, 1, 3))     # (B, H, L, E)
    k = jnp.transpose(k, (0, 2, 1, 3))     # (B, H, S, E)
    v = jnp.transpose(v, (0, 2, 1, 3))     # (B, H, S, Dv)

    ctx, attn = multi_head_attention(q, k, v, return_attn=return_attn,
                                     compute_dtype=compute_dtype)

    wo, bo = params["o"]
    out = headmajor_out_projection(ctx, wo, bo, compute_dtype=compute_dtype)
    return out, attn


# ----------------------------- pure-JAX reference ----------------------------

def _reference_forward(params, queries, keys, values):
    B, L, d_model = queries.shape
    _, S, _ = keys.shape
    H = params["n_heads"]
    wq, bq = params["q"]
    wk, bk = params["k"]
    wv, bv = params["v"]
    wo, bo = params["o"]

    q = (queries @ wq + bq).reshape(B, L, H, -1)
    k = (keys @ wk + bk).reshape(B, S, H, -1)
    v = (values @ wv + bv).reshape(B, S, H, -1)
    E = q.shape[-1]
    scores = jnp.einsum("blhe,bshe->bhls", q, k) / math.sqrt(E)
    attn = jax.nn.softmax(scores, axis=-1)
    out = jnp.einsum("bhls,bshd->blhd", attn, v).reshape(B, L, -1)
    return out @ wo + bo, attn


# ------------------------------------ main -----------------------------------

if __name__ == "__main__":
    B, L, d_model, n_heads = 2, 8, 32, 4

    root = jax.random.PRNGKey(0)
    kp, kx, kq, kk, kv = jax.random.split(root, 5)
    params = init_attention_layer(kp, d_model, n_heads)

    # --- self-attention, attention probabilities requested (exact softmax) ---
    x = jax.random.normal(kx, (B, L, d_model), jnp.float32)
    out, attn = attention_layer_forward(params, x, x, x, attn_mask=None,
                                        return_attn=True)
    out = jax.block_until_ready(out)
    attn = jax.block_until_ready(attn)

    ref_out, ref_attn = _reference_forward(params, x, x, x)
    assert out.shape == (B, L, d_model)
    assert attn.shape == (B, n_heads, L, L)
    assert jnp.allclose(out, ref_out, atol=2e-3, rtol=2e-3)
    assert jnp.allclose(attn, ref_attn, atol=2e-3, rtol=2e-3)

    # --- fast path: no attention output (approx-reciprocal normalization) ---
    out_fast, attn_none = attention_layer_forward(params, x, x, x,
                                                  return_attn=False)
    out_fast = jax.block_until_ready(out_fast)
    assert attn_none is None
    assert jnp.allclose(out_fast, ref_out, atol=2e-3, rtol=2e-3)

    # --- cross-attention (separate projection path) ---
    S = 8
    queries = jax.random.normal(kq, (B, L, d_model), jnp.float32)
    keys = jax.random.normal(kk, (B, S, d_model), jnp.float32)
    values = jax.random.normal(kv, (B, S, d_model), jnp.float32)
    out2, attn2 = attention_layer_forward(params, queries, keys, values,
                                          return_attn=True)
    out2 = jax.block_until_ready(out2)
    attn2 = jax.block_until_ready(attn2)

    ref_out2, ref_attn2 = _reference_forward(params, queries, keys, values)
    assert jnp.allclose(out2, ref_out2, atol=2e-3, rtol=2e-3)
    assert jnp.allclose(attn2, ref_attn2, atol=2e-3, rtol=2e-3)

    # --- bf16 MXU-operand path (production setting on v5e/v6e/v7x) ---
    out_bf, _ = attention_layer_forward(params, x, x, x, return_attn=False,
                                        compute_dtype=jnp.bfloat16)
    out_bf = jax.block_until_ready(out_bf)
    assert out_bf.shape == (B, L, d_model)
    assert bool(jnp.all(jnp.isfinite(out_bf)))
    assert jnp.allclose(out_bf, ref_out, atol=1e-1, rtol=1e-1)

    print("KERNEL_OK")
</pallas_src>

<mosaic_0001>
module attributes {stable_mosaic.version = 11 : i64} {
  func.func @_matmul_bias_kernel(%arg0: i32, %arg1: i32, %arg2: i32, %arg3: memref<16x32xf32, #tpu.memory_space<vmem>>, %arg4: memref<32x96xf32, #tpu.memory_space<vmem>>, %arg5: memref<1x96xf32, #tpu.memory_space<vmem>>, %arg6: memref<16x96xf32, #tpu.memory_space<vmem>>, %arg7: memref<16x96xf32, #tpu.memory_space<vmem>>) attributes {dimension_semantics = [#tpu.dimension_semantics<parallel>, #tpu.dimension_semantics<parallel>, #tpu.dimension_semantics<arbitrary>], iteration_bounds = array<i64: 1, 1, 1>, scalar_prefetch = 0 : i64, scratch_operands = 1 : i64, tpu.core_type = #tpu.core_type<tc>, window_params = [{transform_indices = @transform_0, window_bounds = array<i64: 16, 32>}, {transform_indices = @transform_1, window_bounds = array<i64: 32, 96>}, {transform_indices = @transform_2, window_bounds = array<i64: 1, 96>}, {transform_indices = @transform_3, window_bounds = array<i64: 16, 96>}]} {
    %c0_i32 = arith.constant 0 : i32
    %0 = arith.cmpi eq, %arg2, %c0_i32 : i32
    %1 = arith.extui %0 : i1 to i32
    %c0_i32_0 = arith.constant 0 : i32
    %2 = arith.cmpi ne, %1, %c0_i32_0 : i32
    scf.if %2 {
      %cst_10 = arith.constant 0.000000e+00 : f32
      %12 = vector.broadcast %cst_10 : f32 to vector<16x96xf32>
      %c0_11 = arith.constant 0 : index
      %c0_12 = arith.constant 0 : index
      %13 = vector.load %arg7[%c0_11, %c0_12] : memref<16x96xf32, #tpu.memory_space<vmem>>, vector<16x96xf32>
      tpu.vector_store %arg7[%c0_11, %c0_12], %12 {strides = array<i32>} : memref<16x96xf32, #tpu.memory_space<vmem>>, vector<16x96xf32>,
    } else {
    }
    %c0 = arith.constant 0 : index
    %c0_1 = arith.constant 0 : index
    %3 = vector.load %arg7[%c0, %c0_1] : memref<16x96xf32, #tpu.memory_space<vmem>>, vector<16x96xf32>
    %c0_2 = arith.constant 0 : index
    %c0_3 = arith.constant 0 : index
    %4 = vector.load %arg3[%c0_2, %c0_3] : memref<16x32xf32, #tpu.memory_space<vmem>>, vector<16x32xf32>
    %c0_4 = arith.constant 0 : index
    %c0_5 = arith.constant 0 : index
    %5 = vector.load %arg4[%c0_4, %c0_5] : memref<32x96xf32, #tpu.memory_space<vmem>>, vector<32x96xf32>
    %cst = arith.constant dense<0.000000e+00> : vector<16x96xf32>
    %6 = tpu.matmul %4, %5, %cst {dimension_numbers = #tpu.dot_dimension_numbers<[1], [0], [0], [1], [0, 0, 1, 1], [], []>} : vector<16x32xf32>, vector<32x96xf32>, vector<16x96xf32> -> vector<16x96xf32>
    %7 = arith.addf %3, %6 : vector<16x96xf32>
    %c0_6 = arith.constant 0 : index
    %c0_7 = arith.constant 0 : index
    %8 = vector.load %arg7[%c0_6, %c0_7] : memref<16x96xf32, #tpu.memory_space<vmem>>, vector<16x96xf32>
    tpu.vector_store %arg7[%c0_6, %c0_7], %7 {strides = array<i32>} : memref<16x96xf32, #tpu.memory_space<vmem>>, vector<16x96xf32>,
    %c0_i32_8 = arith.constant 0 : i32
    %9 = arith.cmpi eq, %arg2, %c0_i32_8 : i32
    %10 = arith.extui %9 : i1 to i32
    %c0_i32_9 = arith.constant 0 : i32
    %11 = arith.cmpi ne, %10, %c0_i32_9 : i32
    scf.if %11 {
      %c0_10 = arith.constant 0 : index
      %c0_11 = arith.constant 0 : index
      %12 = vector.load %arg7[%c0_10, %c0_11] : memref<16x96xf32, #tpu.memory_space<vmem>>, vector<16x96xf32>
      %c0_12 = arith.constant 0 : index
      %c0_13 = arith.constant 0 : index
      %13 = vector.load %arg5[%c0_12, %c0_13] : memref<1x96xf32, #tpu.memory_space<vmem>>, vector<1x96xf32>
      %14 = vector.broadcast %13 : vector<1x96xf32> to vector<16x96xf32>
      %15 = arith.addf %12, %14 : vector<16x96xf32>
      %c0_14 = arith.constant 0 : index
      %c0_15 = arith.constant 0 : index
      %16 = vector.load %arg6[%c0_14, %c0_15] : memref<16x96xf32, #tpu.memory_space<vmem>>, vector<16x96xf32>
      tpu.vector_store %arg6[%c0_14, %c0_15], %15 {strides = array<i32>} : memref<16x96xf32, #tpu.memory_space<vmem>>, vector<16x96xf32>,
    } else {
    }
    return
  }
  func.func @transform_0(%arg0: i32, %arg1: i32, %arg2: i32) -> (i32, i32) {
    %c0_i32 = arith.constant 0 : i32
    return %arg0, %arg2 : i32, i32
  }
  func.func @transform_1(%arg0: i32, %arg1: i32, %arg2: i32) -> (i32, i32) {
    %c0_i32 = arith.constant 0 : i32
    return %arg2, %arg1 : i32, i32
  }
  func.func @transform_2(%arg0: i32, %arg1: i32, %arg2: i32) -> (i32, i32) {
    %c0_i32 = arith.constant 0 : i32
    %c0_i32_0 = arith.constant 0 : i32
    return %c0_i32, %arg1 : i32, i32
  }
  func.func @transform_3(%arg0: i32, %arg1: i32, %arg2: i32) -> (i32, i32) {
    %c0_i32 = arith.constant 0 : i32
    return %arg0, %arg1 : i32, i32
  }
}

</mosaic_0001>

<llo_original>
// kernel: tpu_custom_call.1
$region0: #{tpu_custom_call.1}
  #allocation0 [shape = 'u32[]', space=smem, size = 0x4, offset = 0x4, fixed_abs, tag = 'smem constant byte address 0x4 - core index']
  #allocation1 [shape = 'u32[144,128]{1,0:T(1,128)}', space=vmem, size = 0x12000, scoped, tag = 'internal scratch']
  #allocation2 [shape = 'f32[16,96]{1,0:T(8,128)}', space=vmem, size = 0x2000, scoped, tag = 'scratch operand']
  %s0 = inlined_call_operand.hbm [shape: f32[16,32], index: 0, kind: input, shape index: {}]
  %s1 = inlined_call_operand.hbm [shape: f32[32,96], index: 1, kind: input, shape index: {}]
  %s2 = inlined_call_operand.vmem [shape: f32[1,96], index: 2, kind: input, shape index: {}]
  %s3 = inlined_call_operand.hbm [shape: f32[16,96], index: 3, kind: output, shape index: {}]
  %s4 = sld [smem:[#allocation0]]
  $region38: #{tpu_custom_call.1} parent=0
    _
  %s6 = ssub.s32 1, %s4
  %s7 = scalar_select 0, %s6, %s4
  $region1: #{tpu_custom_call.1} parent=0
    #allocation3 [shape = 'u8[8192]{0}', space=vmem, size = 0x2000, scoped, tag = 'input window, operand 0, single buffered']
    #allocation4 [shape = 's32[1]{0}', space=sflag, size = 0x4, scoped, tag = 'scoped memory for tpu_custom_call.1']
    #allocation5 [shape = 's32[1]{0}', space=sflag, size = 0x4, scoped, tag = 'scoped memory for tpu_custom_call.1']
    #allocation6 [shape = 'u8[16384]{0}', space=vmem, size = 0x4000, scoped, tag = 'input window, operand 1, single buffered']
    #allocation7 [shape = 's32[1]{0}', space=sflag, size = 0x4, scoped, tag = 'scoped memory for tpu_custom_call.1']
    #allocation8 [shape = 'u8[8192]{0}', space=vmem, size = 0x2000, scoped, tag = 'output window, operand 0, single buffered']
    %8 = vsyncpa [#allocation4], 0
    %9 = vsyncpa [#allocation7], 0
    %10 = vsyncpa [#allocation5], 0
    // Predicated region
    $region2: #{tpu_custom_call.1} parent=1 // pred_check
      _
    $region3: #{tpu_custom_call.1} parent=1 // pred_check_branch
      %12 = sbr.rel (0) target = $region5
    $region4: #{tpu_custom_call.1} parent=1 // pred_region
      %s14 = ssub.s32 256, 256
      %15 = vsyncadd [#allocation4], %s14
      %s16 = sshll.u32 [#allocation3], 4
      %s17 = int_to_ptr.vmem [resolvable:$true] %s16
      %22 = dma.hbm_to_vmem [thread:$0]  %s0, 256, %s17, [#allocation4], 128, 128, 8
    $region5: #{tpu_custom_call.1} parent=1 // pred_fallthru
      _
    // Predicated region
    $region6: #{tpu_custom_call.1} parent=1 // pred_check
      _
    $region7: #{tpu_custom_call.1} parent=1 // pred_check_branch
      %24 = sbr.rel (0) target = $region9
    $region8: #{tpu_custom_call.1} parent=1 // pred_region
      %s26 = ssub.s32 512, 512
      %27 = vsyncadd [#allocation7], %s26
      %s28 = sshll.u32 [#allocation6], 4
      %s29 = int_to_ptr.vmem [resolvable:$true] %s28
      %34 = dma.hbm_to_vmem [thread:$0]  %s1, 512, %s29, [#allocation7], 128, 128, 8
    $region9: #{tpu_custom_call.1} parent=1 // pred_fallthru
      _
    // Predicated region
    $region10: #{tpu_custom_call.1} parent=1 // pred_check
      _
    $region11: #{tpu_custom_call.1} parent=1 // pred_check_branch
      %36 = sbr.rel (0) target = $region13
    $region12: #{tpu_custom_call.1} parent=1 // pred_region
      _
    $region13: #{tpu_custom_call.1} parent=1 // pred_fallthru
      _
    // Predicated region
    $region14: #{tpu_custom_call.1} parent=1 // pred_check
      _
    $region15: #{tpu_custom_call.1} parent=1 // pred_check_branch
      %38 = sbr.rel (0) target = $region17
    $region16: #{tpu_custom_call.1} parent=1 // pred_region
      %39 = dma.done [#allocation4], 256
    $region17: #{tpu_custom_call.1} parent=1 // pred_fallthru
      _
    // Predicated region
    $region18: #{tpu_custom_call.1} parent=1 // pred_check
      _
    $region19: #{tpu_custom_call.1} parent=1 // pred_check_branch
      %41 = sbr.rel (0) target = $region21
    $region20: #{tpu_custom_call.1} parent=1 // pred_region
      %42 = dma.done [#allocation7], 512
    $region21: #{tpu_custom_call.1} parent=1 // pred_fallthru
      _
    %p43 = scmp.eq.s32.totalorder 0, 0
    // Predicated region
    $region22: #{tpu_custom_call.1} parent=1 // pred_check
      %p44 = pneg %p43
    $region23: #{tpu_custom_call.1} parent=1 // pred_check_branch
      %46 = sbr.rel (%p44) target = $region25
    $region24: #{tpu_custom_call.1} parent=1 // pred_region
      %vm47 = vcmask 785408
      %48 = vst.msk [vmem:[#allocation2] sm:$0xff] %vm47, 0.0
      %49 = vst.msk [vmem:[#allocation2 + $0x8] sm:$0xff] %vm47, 0.0
    $region25: #{tpu_custom_call.1} parent=1 // pred_fallthru
      _
    %v50 = vld [vmem:[#allocation2] sm:$0xff]
    %v51 = vld [vmem:[#allocation2 + $0x8] sm:$0xff]
    %v52 = vld [vmem:[#allocation3] sm:$0xff]
    %v53 = vld [vmem:[#allocation3 + $0x8] sm:$0xff]
    %v54 = vld [vmem:[#allocation6] sm:$0xff]
    %v55 = vld [vmem:[#allocation6 + $0x8] sm:$0xff]
    %v56 = vld [vmem:[#allocation6 + $0x10] sm:$0xff]
    %v57 = vld [vmem:[#allocation6 + $0x18] sm:$0xff]
    %vm58 = vcmask 261120
    %v60 = vsel %vm58, %v52, 0
    %v63 = vsel %vm58, %v53, 0
    %65 = vmatprep.subr.mxu0 0.0
    %66 = vmatpush1.msra.mxu0 %v54
    %67 = vmatprep.subr.mxu0 0.0
    %68 = vmatpush1.msra.mxu0 %v55
    %69 = vmatprep.subr.mxu0 0.0
    %70 = vmatpush1.msra.mxu0 %v56
    %71 = vmatprep.subr.mxu0 0.0
    %72 = vmatpush1.msra.mxu0 %v57
    %73 = vmatprep.subr.mxu0 0.0
    %74 = vmatpush1.msra.mxu0 0.0
    %75 = vmatprep.subr.mxu0 0.0
    %76 = vmatpush1.msra.mxu0 0.0
    %77 = vmatprep.subr.mxu0 0.0
    %78 = vmatpush1.msra.mxu0 0.0
    %79 = vmatprep.subr.mxu0 0.0
    %80 = vmatpush1.msra.mxu0 0.0
    %81 = vmatprep.subr.mxu0 0.0
    %82 = vmatpush1.msra.mxu0 0.0
    %83 = vmatprep.subr.mxu0 0.0
    %84 = vmatpush1.msra.mxu0 0.0
    %85 = vmatprep.subr.mxu0 0.0
    %86 = vmatpush1.msra.mxu0 0.0
    %87 = vmatprep.subr.mxu0 0.0
    %88 = vmatpush1.msra.mxu0 0.0
    %89 = vmatprep.subr.mxu0 0.0
    %90 = vmatpush1.msra.mxu0 0.0
    %91 = vmatprep.subr.mxu0 0.0
    %92 = vmatpush1.msra.mxu0 0.0
    %93 = vmatprep.subr.mxu0 0.0
    %94 = vmatpush1.msra.mxu0 0.0
    %95 = vmatprep.subr.mxu0 0.0
    %96 = vmatpush1.msra.mxu0 0.0
    %97 = vmatprep.subr.mxu0 0.0
    %98 = vmatpush1.msra.mxu0 0.0
    %99 = vmatprep.subr.mxu0 0.0
    %100 = vmatpush1.msra.mxu0 0.0
    %101 = vmatprep.subr.mxu0 0.0
    %102 = vmatpush1.msra.mxu0 0.0
    %103 = vmatprep.subr.mxu0 0.0
    %104 = vmatpush1.msra.mxu0 0.0
    %105 = vmatprep.subr.mxu0 0.0
    %106 = vmatpush1.msra.mxu0 0.0
    %107 = vmatprep.subr.mxu0 0.0
    %108 = vmatpush1.msra.mxu0 0.0
    %109 = vmatprep.subr.mxu0 0.0
    %110 = vmatpush1.msra.mxu0 0.0
    %111 = vmatprep.subr.mxu0 0.0
    %112 = vmatpush1.msra.mxu0 0.0
    %113 = vmatprep.subr.mxu0 0.0
    %114 = vmatpush1.msra.mxu0 0.0
    %115 = vmatprep.subr.mxu0 0.0
    %116 = vmatpush1.msra.mxu0 0.0
    %117 = vmatprep.subr.mxu0 0.0
    %118 = vmatpush1.msra.mxu0 0.0
    %119 = vmatprep.subr.mxu0 0.0
    %120 = vmatpush1.msra.mxu0 0.0
    %121 = vmatprep.subr.mxu0 0.0
    %122 = vmatpush1.msra.mxu0 0.0
    %123 = vmatprep.subr.mxu0 0.0
    %124 = vmatpush1.msra.mxu0 0.0
    %125 = vmatprep.subr.mxu0 0.0
    %126 = vmatpush1.msra.mxu0 0.0
    %127 = vmatprep.subr.mxu0 0.0
    %128 = vmatpush1.msra.mxu0 0.0
    %129 = vmatprep.mubr.f32.mxu0 0.0
    %130 = vmatmul.mubr.f32.gmra.mrb[0].mxu0 %v60
    %v131 = vpop.f32.mrb[0].mxu0
    %v132 = vadd.f32 0.0, %v131
    %v133 = vpop.f32.mrb[0].mxu0
    %134 = vmatprep.mubr.f32.mxu0 0.0
    %135 = vmatmul.mubr.f32.gmra.mrb[0].mxu0 %v63
    %v136 = vpop.f32.mrb[0].mxu0
    %v137 = vadd.f32 0.0, %v136
    %v138 = vpop.f32.mrb[0].mxu0
    %139 = vdwg.mxu0
    %v140 = vadd.f32 %v50, %v132
    %v141 = vadd.f32 %v51, %v137
    %vm142 = vcmask 785408
    %143 = vst.msk [vmem:[#allocation2] sm:$0xff] %vm142, %v140
    %144 = vst.msk [vmem:[#allocation2 + $0x8] sm:$0xff] %vm142, %v141
    // Predicated region
    $region26: #{tpu_custom_call.1} parent=1 // pred_check
      %p145 = pneg %p43
    $region27: #{tpu_custom_call.1} parent=1 // pred_check_branch
      %147 = sbr.rel (%p145) target = $region29
    $region28: #{tpu_custom_call.1} parent=1 // pred_region
      %v148 = vld [vmem:[#allocation2] sm:$0xff]
      %v149 = vld [vmem:[#allocation2 + $0x8] sm:$0xff]
      %v150 = vld [vmem:[%s2] sm:$0x1]
      %v152 = vlaneseq
      %v153 = vshrl.u32 %v152, 7
      %v154 = vsub.s32 0, %v153
      %v155 = vrot.slane %v150, %v154
      %v157 = vadd.f32 %v148, %v155
      %v158 = vadd.f32 %v149, %v155
      %159 = vst.msk [vmem:[#allocation8] sm:$0xff] %vm142, %v157
      %160 = vst.msk [vmem:[#allocation8 + $0x8] sm:$0xff] %vm142, %v158
    $region29: #{tpu_custom_call.1} parent=1 // pred_fallthru
      _
    // Predicated region
    $region30: #{tpu_custom_call.1} parent=1 // pred_check
      _
    $region31: #{tpu_custom_call.1} parent=1 // pred_check_branch
      %162 = sbr.rel (0) target = $region33
    $region32: #{tpu_custom_call.1} parent=1 // pred_region
      %s164 = ssub.s32 256, 256
      %165 = vsyncadd [#allocation5], %s164
      %s166 = sshll.u32 [#allocation8], 4
      %s167 = int_to_ptr.vmem [resolvable:$true] %s166
      %172 = dma.vmem_to_hbm [thread:$0]  %s167, 256, %s3, [#allocation5], 128, 128, 8
    $region33: #{tpu_custom_call.1} parent=1 // pred_fallthru
      _
    // Predicated region
    $region34: #{tpu_custom_call.1} parent=1 // pred_check
      _
    $region35: #{tpu_custom_call.1} parent=1 // pred_check_branch
      %174 = sbr.rel (0) target = $region37
    $region36: #{tpu_custom_call.1} parent=1 // pred_region
      %175 = dma.done [#allocation5], 256
    $region37: #{tpu_custom_call.1} parent=1 // pred_fallthru
      _
    %176 = vsyncpa [#allocation4], 1
    %177 = vsyncpa [#allocation7], 1
    %178 = vsyncpa [#allocation5], 1

</llo_original>
